<compile_context>
chip_gen: v7x
topology: tpu7x:2x2x1
jax: 0.10.0
libtpu: 0.0.40
codegen_flags: <defaults>
</compile_context>

<pallas_src>
import jax
import jax.numpy as jnp
import numpy as np
from jax.experimental import pallas as pl
from jax.experimental.pallas import tpu as pltpu


def _cdiv(a, b):
    return -(-a // b)


def _attn_pool_kernel(valid_ref, x_ref, wt_ref, o_ref):
    # valid_ref: SMEM (1,) int32 -- #pairs whose odd member is real data
    #            (set to nh_pad on the even-length path so masking never runs).
    # x_ref:  (2, TN, Dp)  [0] = even pool members, [1] = odd pool members (bf16).
    # wt_ref: (Dp, Dp)     pre-transposed conv weight [d_in, d_out], resident.
    # o_ref:  (TN, Dp)     bf16 output tile.
    j = pl.program_id(1)
    tn = o_ref.shape[0]

    x0 = x_ref[0]
    x1 = x_ref[1]

    # Only l1 - l0 is needed: one MXU matmul on the difference (bf16 in, f32 acc).
    ldiff = jnp.dot(x1 - x0, wt_ref[...], preferred_element_type=jnp.float32)

    # pair softmax == sigmoid(l0 - l1); exp + approx reciprocal stay on the EUP.
    a0 = pl.reciprocal(1.0 + jnp.exp(ldiff), approx=True)

    x0f = x0.astype(jnp.float32)
    x1f = x1.astype(jnp.float32)
    out = x1f + a0 * (x0f - x1f)

    @pl.when((j + 1) * tn <= valid_ref[0])
    def _():  # fast path: every pair in this tile has a real odd member
        o_ref[...] = out.astype(o_ref.dtype)

    @pl.when((j + 1) * tn > valid_ref[0])
    def _():  # only the tile containing the padded pair pays for the mask
        # padded odd member -> all attention on the even member (== reference's
        # masked_fill(-finfo.max) + softmax up to a ~1e-38 tail).
        row = j * tn + jax.lax.broadcasted_iota(jnp.int32, (tn, 1), 0)
        o_ref[...] = jnp.where(row >= valid_ref[0], x0f, out).astype(o_ref.dtype)


def attention_pool(x, weight, pool_size=2, *, in_dtype=jnp.bfloat16):
    """x: (B, D, N) (PyTorch layout). weight: (D, D, 1, 1) Conv2d weight.
    Returns (B, D, ceil_even(N)//2) exactly like the PyTorch module (pool_size=2)."""
    assert pool_size == 2, "module is hard-coded to p=2 in its Rearrange"
    out_dtype = x.dtype
    b, d, n = x.shape
    remainder = n % pool_size
    if remainder > 0:
        # Faithful to F.pad(x, (0, remainder)); for p=2 the pad element always
        # lands on the ODD slot of the last pair.
        x = jnp.pad(x, ((0, 0), (0, 0), (0, remainder)))
    nh = x.shape[-1] // 2

    d_pad = _cdiv(d, 128) * 128
    itm = jnp.dtype(in_dtype).itemsize

    # ---- tile sizing against the chip's VMEM -------------------------------
    vmem_cap = 64 << 20                       # conservative default (v7x per-TC)
    try:
        vmem_cap = int(pltpu.get_tpu_info().vmem_capacity_bytes)
    except Exception:
        pass
    w_bytes = 2 * d_pad * d_pad * itm         # resident weight (double-buffered)
    # TODO(synk): for D >= ~2048 on v7x, tile the weight over output channels
    # (and/or single-buffer it) instead of keeping the full (Dp, Dp) block resident.
    row_bytes = 2 * (2 * d_pad + d_pad) * itm     # dbl-buffered x-block + out-block per row
    budget = vmem_cap // 2 - (4 << 20)            # slack for compiler scratch / pipeline
    tn = min(max((budget - w_bytes) // row_bytes, 8), 2048, _cdiv(nh, 8) * 8)
    tn = max(8, (tn // 8) * 8)
    # expose >= 4 parallel grid steps (v7x shards "parallel" axes over its 2 TCs)
    while tn > 8 and b * _cdiv(nh, tn) < 4:
        tn = max(8, _cdiv(tn // 2, 8) * 8)
    nh_pad = _cdiv(nh, tn) * tn
    pr, pc = nh_pad - nh, d_pad - d

    footprint = w_bytes + row_bytes * tn
    vmem_limit = int(min(max(footprint + (16 << 20), 32 << 20), vmem_cap - (8 << 20)))

    # ---- one fused HBM pass of input prep ----------------------------------
    # channels-last, split pool pairs into an even/odd leading axis, pad to
    # (tn, 128) multiples, cast to the streaming dtype -- all one XLA fusion.
    xp = jnp.transpose(x, (0, 2, 1)).reshape(b, nh, 2, d)
    xp = jnp.transpose(xp, (0, 2, 1, 3))
    xp = jnp.pad(xp, ((0, 0), (0, 0), (0, pr), (0, pc))).astype(in_dtype)
    wt = jnp.pad(weight.reshape(d, d).T, ((0, pc), (0, pc))).astype(in_dtype)
    # pairs whose odd member is real data; nh_pad on the even path disables masking
    valid = jnp.array([nh - 1 if remainder > 0 else nh_pad], dtype=jnp.int32)

    out = pl.pallas_call(
        _attn_pool_kernel,
        out_shape=jax.ShapeDtypeStruct((b, nh_pad, d_pad), in_dtype),
        grid_spec=pltpu.PrefetchScalarGridSpec(
            num_scalar_prefetch=1,
            grid=(b, nh_pad // tn),
            in_specs=[
                pl.BlockSpec((None, 2, tn, d_pad), lambda i, j, v: (i, 0, j, 0)),
                pl.BlockSpec((d_pad, d_pad), lambda i, j, v: (0, 0)),  # resident weight
            ],
            out_specs=pl.BlockSpec((None, tn, d_pad), lambda i, j, v: (i, j, 0)),
        ),
        compiler_params=pltpu.CompilerParams(
            dimension_semantics=("parallel", "parallel"),
            vmem_limit_bytes=vmem_limit,
        ),
    )(valid, xp, wt)

    # one half-sized pass: crop padding, back to channels-first, caller dtype.
    return jnp.transpose(out[:, :nh, :d], (0, 2, 1)).astype(out_dtype)


def attention_pool_ref(x, weight, pool_size=2):
    """Pure-JAX f32 reference matching the PyTorch forward exactly."""
    b, d, n = x.shape
    remainder = n % pool_size
    needs_padding = remainder > 0
    if needs_padding:
        x = jnp.pad(x, ((0, 0), (0, 0), (0, remainder)))
        mask = jnp.concatenate(
            [jnp.zeros((b, 1, n), bool), jnp.ones((b, 1, remainder), bool)], axis=-1
        )
    xr = x.reshape(b, d, -1, 2)                          # 'b d (n p) -> b d n p'
    w2 = weight.reshape(d, d)
    logits = jnp.einsum("oc,bcnp->bonp", w2, xr)
    if needs_padding:
        mr = mask.reshape(b, 1, -1, 2)
        logits = jnp.where(mr, -jnp.finfo(logits.dtype).max, logits)
    attn = jax.nn.softmax(logits, axis=-1)
    return (xr * attn).sum(-1)


if __name__ == "__main__":
    key = jax.random.PRNGKey(0)
    kx, kw = jax.random.split(key)

    B, D, N = 2, 32, 16                      # small shapes: batch=2, dim=32, seq=16
    x = jax.random.normal(kx, (B, D, N), dtype=jnp.float32)

    # Conv2d(dim, dim, 1, bias=False) weight: (D, D, 1, 1), kaiming-uniform style bound.
    bound = 1.0 / np.sqrt(D)
    weight = jax.random.uniform(kw, (D, D, 1, 1), jnp.float32, minval=-bound, maxval=bound)

    # bf16 streaming (in and out) -> loosened tolerance vs the f32 reference.
    tol = dict(rtol=5e-2, atol=5e-2)

    # Even-length path (no padding; mask branch never runs).
    out = jax.block_until_ready(attention_pool(x, weight))
    ref = attention_pool_ref(x, weight)
    np.testing.assert_allclose(np.asarray(out), np.asarray(ref), **tol)
    assert out.shape == (B, D, N // 2)

    # Odd-length path: exercises the scalar-prefetched padded-pair mask.
    x_odd = x[:, :, : N - 1]
    out_odd = jax.block_until_ready(attention_pool(x_odd, weight))
    ref_odd = attention_pool_ref(x_odd, weight)
    np.testing.assert_allclose(np.asarray(out_odd), np.asarray(ref_odd), **tol)
    assert out_odd.shape == (B, D, N // 2)

    # Multi-tile odd-length path: mask gated (pl.when) to the single tile that
    # holds the padded pair, plus NH row-padding to a tile multiple.
    N2 = 69
    x2 = jax.random.normal(jax.random.PRNGKey(1), (B, D, N2), dtype=jnp.float32)
    out2 = jax.block_until_ready(attention_pool(x2, weight))
    ref2 = attention_pool_ref(x2, weight)
    np.testing.assert_allclose(np.asarray(out2), np.asarray(ref2), **tol)
    assert out2.shape == (B, D, (N2 + 1) // 2)

    print("KERNEL_OK")
</pallas_src>

<mosaic_0001>
module attributes {stable_mosaic.version = 11 : i64} {
  func.func @_attn_pool_kernel(%arg0: i32, %arg1: i32, %arg2: memref<1xi32, #tpu.memory_space<smem>>, %arg3: memref<1x2x8x128xbf16, #tpu.memory_space<vmem>>, %arg4: memref<128x128xbf16, #tpu.memory_space<vmem>>, %arg5: memref<1x8x128xbf16, #tpu.memory_space<vmem>>) attributes {dimension_semantics = [#tpu.dimension_semantics<parallel>, #tpu.dimension_semantics<parallel>], iteration_bounds = array<i64: 2, 1>, scalar_prefetch = 1 : i64, scratch_operands = 0 : i64, tpu.core_type = #tpu.core_type<tc>, window_params = [{transform_indices = @transform_0, window_bounds = array<i64: 1, 2, 8, 128>}, {pipeline_mode = #tpu.pipeline_mode<synchronous>, transform_indices = @transform_1, window_bounds = array<i64: 128, 128>}, {transform_indices = @transform_2, window_bounds = array<i64: 1, 8, 128>}]} {
    %c0 = arith.constant 0 : index
    %c0_0 = arith.constant 0 : index
    %c0_1 = arith.constant 0 : index
    %c0_2 = arith.constant 0 : index
    %0 = vector.load %arg3[%c0, %c0_0, %c0_1, %c0_2] : memref<1x2x8x128xbf16, #tpu.memory_space<vmem>>, vector<1x1x8x128xbf16>
    %1 = vector.shape_cast %0 : vector<1x1x8x128xbf16> to vector<8x128xbf16>
    %c0_3 = arith.constant 0 : index
    %c1 = arith.constant 1 : index
    %c0_4 = arith.constant 0 : index
    %c0_5 = arith.constant 0 : index
    %2 = vector.load %arg3[%c0_3, %c1, %c0_4, %c0_5] : memref<1x2x8x128xbf16, #tpu.memory_space<vmem>>, vector<1x1x8x128xbf16>
    %3 = vector.shape_cast %2 : vector<1x1x8x128xbf16> to vector<8x128xbf16>
    %4 = arith.subf %3, %1 : vector<8x128xbf16>
    %c0_6 = arith.constant 0 : index
    %c0_7 = arith.constant 0 : index
    %5 = vector.load %arg4[%c0_6, %c0_7] : memref<128x128xbf16, #tpu.memory_space<vmem>>, vector<128x128xbf16>
    %cst = arith.constant dense<0.000000e+00> : vector<8x128xf32>
    %6 = tpu.matmul %4, %5, %cst {dimension_numbers = #tpu.dot_dimension_numbers<[1], [0], [0], [1], [0, 0, 1, 1], [], []>} : vector<8x128xbf16>, vector<128x128xbf16>, vector<8x128xf32> -> vector<8x128xf32>
    %7 = math.exp %6 : vector<8x128xf32>
    %cst_8 = arith.constant 1.000000e+00 : f32
    %8 = vector.broadcast %cst_8 : f32 to vector<8x128xf32>
    %9 = arith.addf %8, %7 : vector<8x128xf32>
    %10 = tpu.reciprocal %9 {approx = true} : vector<8x128xf32> -> vector<8x128xf32>
    %11 = arith.extf %1 : vector<8x128xbf16> to vector<8x128xf32>
    %12 = arith.extf %3 : vector<8x128xbf16> to vector<8x128xf32>
    %13 = arith.subf %11, %12 : vector<8x128xf32>
    %14 = arith.mulf %10, %13 : vector<8x128xf32>
    %15 = arith.addf %12, %14 : vector<8x128xf32>
    %c1_i32 = arith.constant 1 : i32
    %16 = arith.addi %arg1, %c1_i32 : i32
    %c8_i32 = arith.constant 8 : i32
    %17 = arith.muli %16, %c8_i32 : i32
    %c0_9 = arith.constant 0 : index
    %18 = memref.load %arg2[%c0_9] : memref<1xi32, #tpu.memory_space<smem>>
    %19 = arith.cmpi sle, %17, %18 : i32
    %20 = arith.extui %19 : i1 to i32
    %c0_i32 = arith.constant 0 : i32
    %21 = arith.cmpi ne, %20, %c0_i32 : i32
    scf.if %21 {
      %28 = arith.truncf %15 : vector<8x128xf32> to vector<8x128xbf16>
      %c0_14 = arith.constant 0 : index
      %c0_15 = arith.constant 0 : index
      %c0_16 = arith.constant 0 : index
      %29 = vector.load %arg5[%c0_14, %c0_15, %c0_16] : memref<1x8x128xbf16, #tpu.memory_space<vmem>>, vector<1x8x128xbf16>
      %30 = vector.shape_cast %29 : vector<1x8x128xbf16> to vector<8x128xbf16>
      %31 = vector.shape_cast %28 : vector<8x128xbf16> to vector<1x8x128xbf16>
      tpu.vector_store %arg5[%c0_14, %c0_15, %c0_16], %31 {strides = array<i32>} : memref<1x8x128xbf16, #tpu.memory_space<vmem>>, vector<1x8x128xbf16>,
    } else {
    }
    %c1_i32_10 = arith.constant 1 : i32
    %22 = arith.addi %arg1, %c1_i32_10 : i32
    %c8_i32_11 = arith.constant 8 : i32
    %23 = arith.muli %22, %c8_i32_11 : i32
    %c0_12 = arith.constant 0 : index
    %24 = memref.load %arg2[%c0_12] : memref<1xi32, #tpu.memory_space<smem>>
    %25 = arith.cmpi sgt, %23, %24 : i32
    %26 = arith.extui %25 : i1 to i32
    %c0_i32_13 = arith.constant 0 : i32
    %27 = arith.cmpi ne, %26, %c0_i32_13 : i32
    scf.if %27 {
      %c8_i32_14 = arith.constant 8 : i32
      %28 = arith.muli %arg1, %c8_i32_14 : i32
      %29 = tpu.iota {dimensions = array<i32: 0>} : vector<8x1xi32>
      %30 = vector.broadcast %28 : i32 to vector<8x1xi32>
      %31 = arith.addi %30, %29 : vector<8x1xi32>
      %c0_15 = arith.constant 0 : index
      %32 = memref.load %arg2[%c0_15] : memref<1xi32, #tpu.memory_space<smem>>
      %33 = vector.broadcast %32 : i32 to vector<8x1xi32>
      %34 = arith.cmpi sge, %31, %33 : vector<8x1xi32>
      %35 = vector.shape_cast %34 : vector<8x1xi1> to vector<8x1xi1>
      %36 = vector.broadcast %35 : vector<8x1xi1> to vector<8x128xi1>
      %37 = arith.select %36, %11, %15 : vector<8x128xi1>, vector<8x128xf32>
      %38 = arith.truncf %37 : vector<8x128xf32> to vector<8x128xbf16>
      %c0_16 = arith.constant 0 : index
      %c0_17 = arith.constant 0 : index
      %c0_18 = arith.constant 0 : index
      %39 = vector.load %arg5[%c0_16, %c0_17, %c0_18] : memref<1x8x128xbf16, #tpu.memory_space<vmem>>, vector<1x8x128xbf16>
      %40 = vector.shape_cast %39 : vector<1x8x128xbf16> to vector<8x128xbf16>
      %41 = vector.shape_cast %38 : vector<8x128xbf16> to vector<1x8x128xbf16>
      tpu.vector_store %arg5[%c0_16, %c0_17, %c0_18], %41 {strides = array<i32>} : memref<1x8x128xbf16, #tpu.memory_space<vmem>>, vector<1x8x128xbf16>,
    } else {
    }
    return
  }
  func.func @transform_0(%arg0: i32, %arg1: i32, %arg2: memref<1xi32, #tpu.memory_space<smem>>) -> (i32, i32, i32, i32) {
    %c0_i32 = arith.constant 0 : i32
    %c0_i32_0 = arith.constant 0 : i32
    %c0_i32_1 = arith.constant 0 : i32
    return %arg0, %c0_i32, %arg1, %c0_i32_0 : i32, i32, i32, i32
  }
  func.func @transform_1(%arg0: i32, %arg1: i32, %arg2: memref<1xi32, #tpu.memory_space<smem>>) -> (i32, i32) {
    %c0_i32 = arith.constant 0 : i32
    %c0_i32_0 = arith.constant 0 : i32
    %c0_i32_1 = arith.constant 0 : i32
    return %c0_i32, %c0_i32_0 : i32, i32
  }
  func.func @transform_2(%arg0: i32, %arg1: i32, %arg2: memref<1xi32, #tpu.memory_space<smem>>) -> (i32, i32, i32) {
    %c0_i32 = arith.constant 0 : i32
    %c0_i32_0 = arith.constant 0 : i32
    return %arg0, %arg1, %c0_i32 : i32, i32, i32
  }
}

</mosaic_0001>

<llo_original>
// kernel: tpu_custom_call.1
$region0: #{tpu_custom_call.1}
  #allocation0 [shape = 'u32[]', space=smem, size = 0x4, offset = 0x4, fixed_abs, tag = 'smem constant byte address 0x4 - core index']
  #allocation1 [shape = 'u32[144,128]{1,0:T(1,128)}', space=vmem, size = 0x12000, scoped, tag = 'internal scratch']
  #allocation2 [shape = 's32[1]{0}', space=sflag, size = 0x4, scoped, tag = 'scoped memory for tpu_custom_call.1']
  #allocation3 [shape = 's32[1]{0:T(128)S(6)}', space=smem, size = 0x200, scoped, tag = 'prefetched SMEM operand 0']
  %s0 = inlined_call_operand.<no memory space> [shape: s32[1], index: 0, kind: input, shape index: {}]
  %s1 = inlined_call_operand.hbm [shape: bf16[2,2,8,128], index: 1, kind: input, shape index: {}]
  %s2 = inlined_call_operand.hbm [shape: bf16[128,128], index: 2, kind: input, shape index: {}]
  %s3 = inlined_call_operand.hbm [shape: bf16[2,8,128], index: 3, kind: output, shape index: {}]
  %s4 = sld [smem:[#allocation0]]
  $region57: #{tpu_custom_call.1} parent=0
    _
  %s6 = ssub.s32 1, %s4
  %s7 = scalar_select 0, %s6, %s4
  %8 = sst [smem:[#allocation3]] %s0
  $region1: #{tpu_custom_call.1} parent=0
    #allocation4 [shape = 'u8[8192]{0}', space=vmem, size = 0x2000, scoped, tag = 'input window, operand 1']
    #allocation5 [shape = 's32[2]{0}', space=sflag, size = 0x8, scoped, tag = 'scoped memory for tpu_custom_call.1']
    #allocation6 [shape = 's32[2]{0}', space=sflag, size = 0x8, scoped, tag = 'scoped memory for tpu_custom_call.1']
    #allocation7 [shape = 'u8[32768]{0}', space=vmem, size = 0x8000, scoped, tag = 'input window, operand 2, single buffered']
    #allocation8 [shape = 's32[1]{0}', space=sflag, size = 0x4, scoped, tag = 'scoped memory for tpu_custom_call.1']
    #allocation9 [shape = 'u8[4096]{0}', space=vmem, size = 0x1000, scoped, tag = 'output window, operand 0']
    %9 = vsyncpa [#allocation5], 0
    %s10 = scalar_lea.sflag [#allocation5], 1
    %11 = vsyncpa %s10, 0
    %12 = vsyncpa [#allocation8], 0
    %13 = vsyncpa [#allocation6], 0
    %s14 = scalar_lea.sflag [#allocation6], 1
    %15 = vsyncpa %s14, 0
    loop: start=0, step=1, limit=4
    $region2: #{tpu_custom_call.1} parent=1 // loop_pre_header
      _
    $region3: #{tpu_custom_call.1} parent=1 // loop_header
      %s17 = sphi 0, %s21
      %p18 = scmp.ge.s32.totalorder %s17, 4
      %s24 = sphi 0, %s36
      %s25 = sphi 0, %s32
      %s26 = sphi 0, %s24
      %s27 = sphi 0, %s25
      %s28 = sphi 0, %s26
      %s29 = sphi 0, %s27
      %s41 = sphi 0, %s43
      %s44 = sphi 0, %s41
      %s45 = sphi 0, %s44
      %s61 = sphi 0, %s45
      %s65 = sphi 0, %s65
      %s67 = sphi 0, %s65
      %s68 = sphi 0, %s67
      %s82 = sphi 0, %s68
      %s90 = sphi 0, %s92
      %s93 = sphi 0, %s90
      %s94 = sphi 0, %s93
      %s110 = sphi 0, %s94
    $region4: #{tpu_custom_call.1} parent=1 // loop_header_branch
      %20 = sbr.rel (%p18) target = $region8
    $region5: #{tpu_custom_call.1} parent=1 // loop_body
      %s22 = ssub.s32 %s17, 1
      %s23 = ssub.s32 %s17, 2
      %s30 = sadd.s32 1, %s25
      %p31 = scmp.ge.s32.totalorder %s30, 1
      %s32 = scalar_select %p31, 0, %s30
      %s33 = sadd.s32 1, %s24
      %s34 = scalar_select %p31, %s33, %s24
      %p35 = scmp.ge.s32.totalorder %s34, 2
      %s36 = scalar_select %p35, 0, %s34
      %s37 = ssub.s32 %s24, %s36
      %s38 = ssub.s32 %s25, %s32
      %s39 = sor.u32 %s37, %s38
      %p40 = scmp.eq.s32.totalorder %s39, 0
      %s42 = sadd.s32 %s41, 1
      %s43 = scalar_select %p40, %s41, %s42
      %p46 = pneg %p40
      %p47 = scmp.eq.s32.totalorder %s17, 1
      %p48 = por %p46, %p47
      %p49 = scmp.ne.s32.totalorder %s41, %s44
      %p50 = scmp.eq.s32.totalorder %s17, 0
      %p51 = por %p49, %p50
      %p52 = scmp.ne.s32.totalorder %s41, %s44
      %p53 = scmp.eq.s32.totalorder %s22, 1
      %p54 = por %p52, %p53
      %p55 = scmp.ne.s32.totalorder %s44, %s45
      %p56 = scmp.eq.s32.totalorder %s22, 0
      %p57 = por %p55, %p56
      %p58 = scmp.ne.s32.totalorder %s44, %s45
      %p59 = scmp.eq.s32.totalorder %s23, 1
      %p60 = por %p58, %p59
      %p62 = scmp.ne.s32.totalorder %s45, %s61
      %p63 = scmp.eq.s32.totalorder %s23, 0
      %p64 = por %p62, %p63
      %s66 = sadd.s32 %s65, 1
      %p69 = scmp.eq.s32.totalorder %s17, 1
      %p70 = scmp.ne.s32.totalorder %s65, %s67
      %p71 = scmp.eq.s32.totalorder %s17, 0
      %p72 = por %p70, %p71
      %p73 = scmp.ne.s32.totalorder %s65, %s67
      %p74 = scmp.eq.s32.totalorder %s22, 1
      %p75 = por %p73, %p74
      %p76 = scmp.ne.s32.totalorder %s67, %s68
      %p77 = scmp.eq.s32.totalorder %s22, 0
      %p78 = por %p76, %p77
      %p79 = scmp.ne.s32.totalorder %s67, %s68
      %p80 = scmp.eq.s32.totalorder %s23, 1
      %p81 = por %p79, %p80
      %p83 = scmp.ne.s32.totalorder %s68, %s82
      %p84 = scmp.eq.s32.totalorder %s23, 0
      %p85 = por %p83, %p84
      %s86 = ssub.s32 %s24, %s36
      %s87 = ssub.s32 %s25, %s32
      %s88 = sor.u32 %s86, %s87
      %p89 = scmp.eq.s32.totalorder %s88, 0
      %s91 = sadd.s32 %s90, 1
      %s92 = scalar_select %p89, %s90, %s91
      %p95 = pneg %p89
      %p96 = scmp.eq.s32.totalorder %s17, 1
      %p97 = por %p95, %p96
      %p98 = scmp.ne.s32.totalorder %s90, %s93
      %p99 = scmp.eq.s32.totalorder %s17, 0
      %p100 = por %p98, %p99
      %p101 = scmp.ne.s32.totalorder %s90, %s93
      %p102 = scmp.eq.s32.totalorder %s22, 1
      %p103 = por %p101, %p102
      %p104 = scmp.ne.s32.totalorder %s93, %s94
      %p105 = scmp.eq.s32.totalorder %s22, 0
      %p106 = por %p104, %p105
      %p107 = scmp.ne.s32.totalorder %s93, %s94
      %p108 = scmp.eq.s32.totalorder %s23, 1
      %p109 = por %p107, %p108
      %p111 = scmp.ne.s32.totalorder %s94, %s110
      %p112 = scmp.eq.s32.totalorder %s23, 0
      %p113 = por %p111, %p112
      %p114 = scmp.le.s32.totalorder 1, %s17
      %p115 = scmp.lt.s32.totalorder %s17, 3
      %p116 = pnand %p114, %p115
      %p117 = pneg %p116
      // Predicated region
      $region9: #{tpu_custom_call.1} parent=5 // pred_check
        _
      $region10: #{tpu_custom_call.1} parent=5 // pred_check_branch
        %119 = sbr.rel (%p116) target = $region12
      $region11: #{tpu_custom_call.1} parent=5 // pred_region
        %s120 = ssub.s32 %s17, 1
        // Predicated region
        $region13: #{tpu_custom_call.1} parent=11 // pred_check
          %p121 = pneg %p78
        $region14: #{tpu_custom_call.1} parent=11 // pred_check_branch
          %123 = sbr.rel (%p121) target = $region16
        $region15: #{tpu_custom_call.1} parent=11 // pred_region
          %s125 = ssub.s32 1024, 1024
          %126 = vsyncadd [#allocation8], %s125
          %s127 = sshll.u32 [#allocation7], 4
          %s128 = int_to_ptr.vmem [resolvable:$true] %s127
          %133 = dma.hbm_to_vmem [thread:$0]  %s2, 1024, %s128, [#allocation8], 64, 64, 4
        $region16: #{tpu_custom_call.1} parent=11 // pred_fallthru
          _
      $region12: #{tpu_custom_call.1} parent=5 // pred_fallthru
        _
      %p134 = scmp.lt.s32.totalorder %s17, 2
      // Predicated region
      $region17: #{tpu_custom_call.1} parent=5 // pred_check
        %p135 = pneg %p134
      $region18: #{tpu_custom_call.1} parent=5 // pred_check_branch
        %137 = sbr.rel (%p135) target = $region20
      $region19: #{tpu_custom_call.1} parent=5 // pred_region
        // Predicated region
        $region21: #{tpu_custom_call.1} parent=19 // pred_check
          %p138 = pneg %p51
        $region22: #{tpu_custom_call.1} parent=19 // pred_check_branch
          %140 = sbr.rel (%p138) target = $region24
        $region23: #{tpu_custom_call.1} parent=19 // pred_region
          %s141 = sand.u32 %s41, 1
          %s142 = scalar_lea.sflag [#allocation5], %s141
          %s143 = sand.u32 %s41, 1
          %s144 = smul.addr %s143, 8
          %s145 = scalar_lea.vmem [#allocation4], %s144
          %s147 = ssub.s32 128, 128
          %148 = vsyncadd %s142, %s147
          %s149 = smul.addr %s24, 2
          %s150 = sadd.s32 %s25, %s149
          %s151 = smul.addr %s150, 64
          %s152 = scalar_lea.hbm %s1, %s151
          %s153 = sshll.u32 %s145, 4
          %s154 = int_to_ptr.vmem [resolvable:$true] %s153
          %159 = dma.hbm_to_vmem [thread:$0]  %s152, 128, %s154, %s142, 64, 64, 4
        $region24: #{tpu_custom_call.1} parent=19 // pred_fallthru
          _
      $region20: #{tpu_custom_call.1} parent=5 // pred_fallthru
        _
      %p160 = scmp.le.s32.totalorder 1, %s17
      %p161 = scmp.lt.s32.totalorder %s17, 3
      %p162 = pnand %p160, %p161
      %p163 = pneg %p162
      // Predicated region
      $region25: #{tpu_custom_call.1} parent=5 // pred_check
        _
      $region26: #{tpu_custom_call.1} parent=5 // pred_check_branch
        %165 = sbr.rel (%p162) target = $region28
      $region27: #{tpu_custom_call.1} parent=5 // pred_region
        %s166 = ssub.s32 %s17, 1
        %s167 = sand.u32 %s44, 1
        %s168 = scalar_lea.sflag [#allocation5], %s167
        %s169 = sand.u32 %s44, 1
        %s170 = smul.addr %s169, 8
        %s171 = scalar_lea.vmem [#allocation4], %s170
        // Predicated region
        $region29: #{tpu_custom_call.1} parent=27 // pred_check
          %p172 = pneg %p57
        $region30: #{tpu_custom_call.1} parent=27 // pred_check_branch
          %174 = sbr.rel (%p172) target = $region32
        $region31: #{tpu_custom_call.1} parent=27 // pred_region
          %175 = dma.done %s168, 128
        $region32: #{tpu_custom_call.1} parent=27 // pred_fallthru
          _
        // Predicated region
        $region33: #{tpu_custom_call.1} parent=27 // pred_check
          %p176 = pneg %p78
        $region34: #{tpu_custom_call.1} parent=27 // pred_check_branch
          %178 = sbr.rel (%p176) target = $region36
        $region35: #{tpu_custom_call.1} parent=27 // pred_region
          %179 = dma.done [#allocation8], 1024
        $region36: #{tpu_custom_call.1} parent=27 // pred_fallthru
          _
        %s180 = sand.u32 %s44, 1
        %s181 = scalar_lea.sflag [#allocation5], %s180
        %s182 = sand.u32 %s44, 1
        %s183 = smul.addr %s182, 8
        %s184 = scalar_lea.vmem [#allocation4], %s183
        %p185 = pneg %p57
        %p186 = pneg %p54
        %p187 = pneg %p78
        %p188 = pneg %p75
        %p189 = pneg %p106
        %p190 = pneg %p103
        %s191 = sand.u32 %s93, 1
        %s192 = scalar_lea.sflag [#allocation6], %s191
        %s193 = sand.u32 %s93, 1
        %s194 = smul.addr %s193, 4
        %s195 = scalar_lea.vmem [#allocation9], %s194
        %v197 = vld [vmem:[%s171] sm:$0xf]
        %s198 = scalar_lea.vmem %s171, 4 [#allocation4]
        %v199 = vld [vmem:[%s198] sm:$0xf]
        %v200 = vsub.bf16 %v199, %v197
        %v201 = vld [vmem:[#allocation7] sm:$0xf]
        %v202 = vld [vmem:[#allocation7 + $0x4] sm:$0xf]
        %v203 = vld [vmem:[#allocation7 + $0x8] sm:$0xf]
        %v204 = vld [vmem:[#allocation7 + $0xc] sm:$0xf]
        %v205 = vld [vmem:[#allocation7 + $0x10] sm:$0xf]
        %v206 = vld [vmem:[#allocation7 + $0x14] sm:$0xf]
        %v207 = vld [vmem:[#allocation7 + $0x18] sm:$0xf]
        %v208 = vld [vmem:[#allocation7 + $0x1c] sm:$0xf]
        %v209 = vld [vmem:[#allocation7 + $0x20] sm:$0xf]
        %v210 = vld [vmem:[#allocation7 + $0x24] sm:$0xf]
        %v211 = vld [vmem:[#allocation7 + $0x28] sm:$0xf]
        %v212 = vld [vmem:[#allocation7 + $0x2c] sm:$0xf]
        %v213 = vld [vmem:[#allocation7 + $0x30] sm:$0xf]
        %v214 = vld [vmem:[#allocation7 + $0x34] sm:$0xf]
        %v215 = vld [vmem:[#allocation7 + $0x38] sm:$0xf]
        %v216 = vld [vmem:[#allocation7 + $0x3c] sm:$0xf]
        %v233 = vunpack.c.l.b16 %v201
        %v234 = vunpack.c.l.b16 %v202
        %v235 = vunpack.c.l.b16 %v203
        %v236 = vunpack.c.l.b16 %v204
        %v237 = vunpack.c.l.b16 %v205
        %v238 = vunpack.c.l.b16 %v206
        %v239 = vunpack.c.l.b16 %v207
        %v240 = vunpack.c.l.b16 %v208
        %v241 = vunpack.c.l.b16 %v209
        %v242 = vunpack.c.l.b16 %v210
        %v243 = vunpack.c.l.b16 %v211
        %v244 = vunpack.c.l.b16 %v212
        %v245 = vunpack.c.l.b16 %v213
        %v246 = vunpack.c.l.b16 %v214
        %v247 = vunpack.c.l.b16 %v215
        %v248 = vunpack.c.l.b16 %v216
        %v249 = vpack.c.b16 %v234, %v233
        %v250 = vpack.c.b16 %v236, %v235
        %v251 = vpack.c.b16 %v238, %v237
        %v252 = vpack.c.b16 %v240, %v239
        %v253 = vpack.c.b16 %v242, %v241
        %v254 = vpack.c.b16 %v244, %v243
        %v255 = vpack.c.b16 %v246, %v245
        %v256 = vpack.c.b16 %v248, %v247
        %265 = vmatprep.subr.bf16.mxu0 0
        %266 = vmatpush1.bf16.msra.mxu0 %v249
        %267 = vmatprep.subr.bf16.mxu0 0
        %268 = vmatpush1.bf16.msra.mxu0 %v250
        %269 = vmatprep.subr.bf16.mxu0 0
        %270 = vmatpush1.bf16.msra.mxu0 %v251
        %271 = vmatprep.subr.bf16.mxu0 0
        %272 = vmatpush1.bf16.msra.mxu0 %v252
        %273 = vmatprep.subr.bf16.mxu0 0
        %274 = vmatpush1.bf16.msra.mxu0 %v253
        %275 = vmatprep.subr.bf16.mxu0 0
        %276 = vmatpush1.bf16.msra.mxu0 %v254
        %277 = vmatprep.subr.bf16.mxu0 0
        %278 = vmatpush1.bf16.msra.mxu0 %v255
        %279 = vmatprep.subr.bf16.mxu0 0
        %280 = vmatpush1.bf16.msra.mxu0 %v256
        %281 = vmatprep.subr.bf16.mxu0 0
        %282 = vmatpush1.bf16.msra.mxu0 0
        %283 = vmatprep.subr.bf16.mxu0 0
        %284 = vmatpush1.bf16.msra.mxu0 0
        %285 = vmatprep.subr.bf16.mxu0 0
        %286 = vmatpush1.bf16.msra.mxu0 0
        %287 = vmatprep.subr.bf16.mxu0 0
        %288 = vmatpush1.bf16.msra.mxu0 0
        %289 = vmatprep.subr.bf16.mxu0 0
        %290 = vmatpush1.bf16.msra.mxu0 0
        %291 = vmatprep.subr.bf16.mxu0 0
        %292 = vmatpush1.bf16.msra.mxu0 0
        %293 = vmatprep.subr.bf16.mxu0 0
        %294 = vmatpush1.bf16.msra.mxu0 0
        %295 = vmatprep.subr.bf16.mxu0 0
        %296 = vmatpush1.bf16.msra.mxu0 0
        %297 = vmatprep.mubr.bf16.mxu0 0
        %298 = vmatmul.mubr.bf16.gmra.mrb[0].mxu0 %v200
        %v299 = vpop.f32.mrb[0].mxu0
        %v300 = vadd.f32 0.0, %v299
        %v301 = vpop.f32.mrb[0].mxu0
        %v302 = vpop.f32.mrb[0].mxu0
        %v303 = vpop.f32.mrb[0].mxu0
        %304 = vdwg.mxu0
        %v305 = vmul.f32 %v300, 1.442695
        %v306 = vpow.pop %v305
        %v307 = vadd.f32 %v306, 1.0
        %v308 = vrcp.pop %v307
        %v309 = vunpack.c.l.bf16 %v197
        %v310 = vunpack.c.l.bf16 %v199
        %v311 = vsub.f32 %v309, %v310
        %v312 = vmul.f32 %v308, %v311
        %v313 = vadd.f32 %v310, %v312
        %s314 = sadd.s32 %s27, 1
        %s315 = smul.u32 %s314, 8
        %s316 = sld [smem:[#allocation3]]
        %p317 = scmp.le.s32.totalorder %s315, %s316
        // Predicated region
        $region37: #{tpu_custom_call.1} parent=27 // pred_check
          %p318 = pneg %p317
        $region38: #{tpu_custom_call.1} parent=27 // pred_check_branch
          %320 = sbr.rel (%p318) target = $region40
        $region39: #{tpu_custom_call.1} parent=27 // pred_region
          %v321 = vpack.c.bf16 %v313, %v313
          %322 = vst [vmem:[%s195] sm:$0xf] %v321
        $region40: #{tpu_custom_call.1} parent=27 // pred_fallthru
          _
        %s323 = sld [smem:[#allocation3]]
        %p324 = scmp.gt.s32.totalorder %s315, %s323
        // Predicated region
        $region41: #{tpu_custom_call.1} parent=27 // pred_check
          %p325 = pneg %p324
        $region42: #{tpu_custom_call.1} parent=27 // pred_check_branch
          %327 = sbr.rel (%p325) target = $region44
        $region43: #{tpu_custom_call.1} parent=27 // pred_region
          %s328 = smul.u32 %s27, 8
          %v329 = vlaneseq
          %v330 = vshrl.u32 %v329, 7
          %v331 = vstv %s328
          %v332 = vadd.s32 %v331, %v330
          %s333 = sld [smem:[#allocation3]]
          %v334 = vstv %s333
          %vm335 = vcmp.ge.s32.totalorder %v332, %v334
          %v336 = vsel %vm335, 1, 0
          %vm337 = vcmp.eq.s32.totalorder %v336, 1
          %v338 = vsel %vm337, %v309, %v313
          %v339 = vpack.c.bf16 %v338, %v338
          %340 = vst [vmem:[%s195] sm:$0xf] %v339
        $region44: #{tpu_custom_call.1} parent=27 // pred_fallthru
          _
        %s341 = sand.u32 %s93, 1
        %s342 = scalar_lea.sflag [#allocation6], %s341
        %s343 = sand.u32 %s93, 1
        %s344 = smul.addr %s343, 4
        %s345 = scalar_lea.vmem [#allocation9], %s344
        // Predicated region
        $region45: #{tpu_custom_call.1} parent=27 // pred_check
          %p346 = pneg %p103
        $region46: #{tpu_custom_call.1} parent=27 // pred_check_branch
          %348 = sbr.rel (%p346) target = $region48
        $region47: #{tpu_custom_call.1} parent=27 // pred_region
          %s350 = ssub.s32 64, 64
          %351 = vsyncadd %s342, %s350
          %s352 = sadd.s32 %s27, %s26
          %s353 = smul.addr %s352, 64
          %s354 = scalar_lea.hbm %s3, %s353
          %s356 = sshll.u32 %s345, 4
          %s357 = int_to_ptr.vmem [resolvable:$true] %s356
          %359 = dma.vmem_to_hbm [thread:$0]  %s357, 64, %s354, %s342
        $region48: #{tpu_custom_call.1} parent=27 // pred_fallthru
          _
      $region28: #{tpu_custom_call.1} parent=5 // pred_fallthru
        _
      %p360 = scmp.le.s32.totalorder 2, %s17
      // Predicated region
      $region49: #{tpu_custom_call.1} parent=5 // pred_check
        %p361 = pneg %p360
      $region50: #{tpu_custom_call.1} parent=5 // pred_check_branch
        %363 = sbr.rel (%p361) target = $region52
      $region51: #{tpu_custom_call.1} parent=5 // pred_region
        %s364 = ssub.s32 %s17, 2
        // Predicated region
        $region53: #{tpu_custom_call.1} parent=51 // pred_check
          %p365 = pneg %p109
        $region54: #{tpu_custom_call.1} parent=51 // pred_check_branch
          %367 = sbr.rel (%p365) target = $region56
        $region55: #{tpu_custom_call.1} parent=51 // pred_region
          %s368 = sand.u32 %s94, 1
          %s369 = scalar_lea.sflag [#allocation6], %s368
          %s370 = sand.u32 %s94, 1
          %s371 = smul.addr %s370, 4
          %s372 = scalar_lea.vmem [#allocation9], %s371
          %373 = dma.done %s369, 64
        $region56: #{tpu_custom_call.1} parent=51 // pred_fallthru
          _
      $region52: #{tpu_custom_call.1} parent=5 // pred_fallthru
        _
    $region6: #{tpu_custom_call.1} parent=1 // loop_footer
      %s21 = sadd.s32 1, %s17
    $region7: #{tpu_custom_call.1} parent=1 // loop_footer_branch
      %16 = sbr.rel target = $region3
    $region8: #{tpu_custom_call.1} parent=1 // loop_exit
      _
    %374 = vsyncpa [#allocation5], 1
    %s375 = scalar_lea.sflag [#allocation5], 1
    %376 = vsyncpa %s375, 1
    %377 = vsyncpa [#allocation8], 1
    %378 = vsyncpa [#allocation6], 1
    %s379 = scalar_lea.sflag [#allocation6], 1
    %380 = vsyncpa %s379, 1

</llo_original>
